<compile_context>
chip_gen: v6e
topology: v6e:2x2x1
jax: 0.10.0
libtpu: 0.0.40
codegen_flags: <defaults>
</compile_context>

<pallas_src>
import functools

import jax
import jax.numpy as jnp
import numpy as np
from jax.experimental import pallas as pl
from jax.experimental.pallas import tpu as pltpu


def _round_up(x, m):
    return ((x + m - 1) // m) * m


def _mr_mlp_fused_kernel(x_ref, w_ref, b_ref, o_ref, *, precision):
    # One MXU matmul over the fused, lane-padded (d_model, 3*N_pad) weight
    # plus one VPU bias add; f32 accumulation regardless of operand dtype.
    o_ref[...] = (
        jnp.dot(x_ref[...], w_ref[...],
                preferred_element_type=jnp.float32, precision=precision)
        + b_ref[...]
    )


@functools.partial(
    jax.jit,
    static_argnames=("n_segment", "d_k", "tile_m", "use_bf16", "precision",
                     "xla_fallback_max_elems"),
)
def mr_mlp_forward(enc_input, params, *, n_segment, d_k, tile_m=512,
                   use_bf16=False, precision=None, xla_fallback_max_elems=0):
    """Pallas implementation of MR_MLP.forward.

    enc_input: (B, L, d_model) float32
    params: dict with
      'w_qkv': (d_model, 3*N_pad)  -- wq|wk|wv fused, pre-transposed,
                                      each block zero-padded to N_pad lanes
      'b_qkv': (1, 3*N_pad)        -- bq|bk|bv fused, same padding
    Returns (X1, X2, X3), each of shape (-1, 1, 32, 2), matching PyTorch.
    """
    B, L, d_model = enc_input.shape
    N = n_segment * d_k
    # The PyTorch module hard-codes .view(-1, 1, 32, 2); fail loudly otherwise.
    assert L * d_k == 64, "MR_MLP's hard-coded view(-1,1,32,2) needs L*d_k==64"
    assert tile_m % 8 == 0, "tile_m must be a multiple of 8 (sublane tiling)"

    w_fused = params["w_qkv"]
    b_fused = params["b_qkv"]
    n3_pad = w_fused.shape[1]
    n_pad = n3_pad // 3
    assert n_pad % 128 == 0 and n_pad >= N, "params must be 128-lane padded"

    M = B * L
    x2d = enc_input.reshape(M, d_model)

    if use_bf16:
        # v6e/v7x: bf16 operands halve HBM traffic; accumulation stays f32.
        x2d = x2d.astype(jnp.bfloat16)
        w_fused = w_fused.astype(jnp.bfloat16)

    if xla_fallback_max_elems and M * n3_pad <= xla_fallback_max_elems:
        # Tiny-problem short-circuit (per perf review): skip pallas_call
        # launch/layout overhead entirely. Disabled by default so the demo
        # below exercises the Pallas path.
        qkv = (jnp.dot(x2d, w_fused, preferred_element_type=jnp.float32,
                       precision=precision) + b_fused)
    else:
        tile_m_eff = M if M <= tile_m else tile_m
        grid_m = pl.cdiv(M, tile_m_eff)

        itm = jnp.dtype(x2d.dtype).itemsize
        x_tile_b = tile_m_eff * d_model * itm
        o_tile_b = tile_m_eff * n3_pad * 4
        w_b = d_model * n3_pad * itm
        bias_b = n3_pad * 4
        # Double-buffered x/out tiles + (conservatively counted as
        # double-buffered) resident weight/bias, with 2x headroom.
        # NOTE: at transformer scale on v7x (64 MiB VMEM), additionally stop
        # double-buffering the constant-index weight (pipeline_mode=
        # pl.Buffered(1)) or add an N/K grid axis; not needed at these sizes.
        footprint = 2 * (x_tile_b + o_tile_b + w_b + bias_b)
        vmem_limit = int(min(64 * 1024 * 1024,
                             max(32 * 1024 * 1024, 2 * footprint)))

        cost = pl.CostEstimate(
            flops=2 * M * d_model * n3_pad,
            transcendentals=0,
            bytes_accessed=(M * d_model * itm + d_model * n3_pad * itm
                            + n3_pad * 4 + M * n3_pad * 4),
        )

        qkv = pl.pallas_call(
            functools.partial(_mr_mlp_fused_kernel, precision=precision),
            out_shape=jax.ShapeDtypeStruct((M, n3_pad), jnp.float32),
            grid=(grid_m,),
            in_specs=[
                pl.BlockSpec((tile_m_eff, d_model), lambda i: (i, 0)),
                pl.BlockSpec((d_model, n3_pad), lambda i: (0, 0)),
                pl.BlockSpec((1, n3_pad), lambda i: (0, 0)),
            ],
            out_specs=pl.BlockSpec((tile_m_eff, n3_pad), lambda i: (i, 0)),
            compiler_params=pltpu.CompilerParams(
                dimension_semantics=("parallel",),
                vmem_limit_bytes=vmem_limit,
            ),
            cost_estimate=cost,
        )(x2d, w_fused, b_fused)

    # Split fused output back into Q / K / V (pure layout glue in JAX).
    # Each block starts on a 128-lane boundary; padding columns are dropped.
    q = qkv[:, 0 * n_pad:0 * n_pad + N]
    k = qkv[:, 1 * n_pad:1 * n_pad + N]
    v = qkv[:, 2 * n_pad:2 * n_pad + N]

    def _rearrange(y):
        # (B*L, S*d_k) -> (B, L, S, d_k) -> (B, S, L, d_k) -> (-1, 1, 32, 2)
        y = y.reshape(B, L, n_segment, d_k)
        y = jnp.transpose(y, (0, 2, 1, 3))
        return y.reshape(-1, 1, 32, 2)

    return _rearrange(q), _rearrange(k), _rearrange(v)


def init_mr_mlp_params(key, d_model, n_segment, d_k):
    """Synthetic init mirroring the PyTorch module, fused + 128-lane padded.

    nn.Linear(d_model, N): weight (N, d_model) ~ N(0, sqrt(2/(d_model+d_k))),
    bias (N,) ~ U(-1/sqrt(d_model), 1/sqrt(d_model)) (PyTorch default).
    Each projection is stored transposed, zero-padded on its output dim to
    N_pad = round_up(N, 128) lanes, then concatenated:
      w_qkv: (d_model, 3*N_pad), b_qkv: (1, 3*N_pad).
    """
    N = n_segment * d_k
    n_pad = _round_up(N, 128)
    std = np.sqrt(2.0 / (d_model + d_k))
    bound = 1.0 / np.sqrt(d_model)
    ks = jax.random.split(key, 6)

    def w(k):   # (d_model, N_pad): transposed for x @ w, zero-padded lanes
        wt = (jax.random.normal(k, (N, d_model), jnp.float32) * std).T
        return jnp.pad(wt, ((0, 0), (0, n_pad - N)))

    def b(k):
        bb = jax.random.uniform(k, (1, N), jnp.float32, -bound, bound)
        return jnp.pad(bb, ((0, 0), (0, n_pad - N)))

    wq, wk, wv = w(ks[0]), w(ks[2]), w(ks[4])
    bq, bk, bv = b(ks[1]), b(ks[3]), b(ks[5])
    return {
        "w_qkv": jnp.concatenate([wq, wk, wv], axis=1),   # (d_model, 3*N_pad)
        "b_qkv": jnp.concatenate([bq, bk, bv], axis=1),   # (1, 3*N_pad)
    }


if __name__ == "__main__":
    # Shapes consistent with the hard-coded .view(-1, 1, 32, 2):
    # L * d_k must equal 64 per (batch, segment) slab -> L = 32, d_k = 2.
    B, L, d_model = 2, 32, 16
    n_segment, d_k = 4, 2
    N = n_segment * d_k

    key = jax.random.PRNGKey(0)
    k_in, k_par = jax.random.split(key)
    enc_input = jax.random.normal(k_in, (B, L, d_model), jnp.float32)
    params = init_mr_mlp_params(k_par, d_model, n_segment, d_k)

    # f32-operand run (bit-comparable to the PyTorch f32 module).
    X1, X2, X3 = mr_mlp_forward(enc_input, params,
                                n_segment=n_segment, d_k=d_k)
    jax.block_until_ready((X1, X2, X3))

    # Pure-numpy reference (same math, no Pallas). Padding columns are zero,
    # so the real weights are the first N columns of each 128-lane block.
    w_qkv = np.asarray(params["w_qkv"])
    b_qkv = np.asarray(params["b_qkv"])
    n_pad = w_qkv.shape[1] // 3

    def ref(x, w, b):
        y = np.asarray(x).reshape(B * L, d_model) @ w + b
        y = y.reshape(B, L, n_segment, d_k).transpose(0, 2, 1, 3)
        return y.reshape(-1, 1, 32, 2)

    refs = [ref(enc_input,
                w_qkv[:, i * n_pad:i * n_pad + N],
                b_qkv[:, i * n_pad:i * n_pad + N]) for i in range(3)]

    assert X1.shape == (B * n_segment, 1, 32, 2)
    np.testing.assert_allclose(np.asarray(X1), refs[0], rtol=1e-5, atol=1e-5)
    np.testing.assert_allclose(np.asarray(X2), refs[1], rtol=1e-5, atol=1e-5)
    np.testing.assert_allclose(np.asarray(X3), refs[2], rtol=1e-5, atol=1e-5)

    # bf16-operand run (v6e/v7x HBM-traffic optimization) with looser
    # tolerance vs the f32 reference, as flagged in the perf review.
    Y1, Y2, Y3 = mr_mlp_forward(enc_input, params,
                                n_segment=n_segment, d_k=d_k, use_bf16=True)
    jax.block_until_ready((Y1, Y2, Y3))
    np.testing.assert_allclose(np.asarray(Y1), refs[0], rtol=3e-2, atol=3e-2)
    np.testing.assert_allclose(np.asarray(Y2), refs[1], rtol=3e-2, atol=3e-2)
    np.testing.assert_allclose(np.asarray(Y3), refs[2], rtol=3e-2, atol=3e-2)

    print("KERNEL_OK")
</pallas_src>

<mosaic_0001>
module attributes {stable_mosaic.version = 11 : i64} {
  func.func @_mr_mlp_fused_kernel(%arg0: i32, %arg1: memref<64x16xf32, #tpu.memory_space<vmem>>, %arg2: memref<16x384xf32, #tpu.memory_space<vmem>>, %arg3: memref<1x384xf32, #tpu.memory_space<vmem>>, %arg4: memref<64x384xf32, #tpu.memory_space<vmem>>) attributes {dimension_semantics = [#tpu.dimension_semantics<parallel>], iteration_bounds = array<i64: 1>, scalar_prefetch = 0 : i64, scratch_operands = 0 : i64, tpu.core_type = #tpu.core_type<tc>, window_params = [{transform_indices = @transform_0, window_bounds = array<i64: 64, 16>}, {pipeline_mode = #tpu.pipeline_mode<synchronous>, transform_indices = @transform_1, window_bounds = array<i64: 16, 384>}, {pipeline_mode = #tpu.pipeline_mode<synchronous>, transform_indices = @transform_2, window_bounds = array<i64: 1, 384>}, {transform_indices = @transform_3, window_bounds = array<i64: 64, 384>}]} {
    %c0 = arith.constant 0 : index
    %c0_0 = arith.constant 0 : index
    %0 = vector.load %arg1[%c0, %c0_0] : memref<64x16xf32, #tpu.memory_space<vmem>>, vector<64x16xf32>
    %c0_1 = arith.constant 0 : index
    %c0_2 = arith.constant 0 : index
    %1 = vector.load %arg2[%c0_1, %c0_2] : memref<16x384xf32, #tpu.memory_space<vmem>>, vector<16x384xf32>
    %cst = arith.constant dense<0.000000e+00> : vector<64x384xf32>
    %2 = tpu.matmul %0, %1, %cst {dimension_numbers = #tpu.dot_dimension_numbers<[1], [0], [0], [1], [0, 0, 1, 1], [], []>} : vector<64x16xf32>, vector<16x384xf32>, vector<64x384xf32> -> vector<64x384xf32>
    %c0_3 = arith.constant 0 : index
    %c0_4 = arith.constant 0 : index
    %3 = vector.load %arg3[%c0_3, %c0_4] : memref<1x384xf32, #tpu.memory_space<vmem>>, vector<1x384xf32>
    %4 = vector.broadcast %3 : vector<1x384xf32> to vector<64x384xf32>
    %5 = arith.addf %2, %4 : vector<64x384xf32>
    %c0_5 = arith.constant 0 : index
    %c0_6 = arith.constant 0 : index
    %6 = vector.load %arg4[%c0_5, %c0_6] : memref<64x384xf32, #tpu.memory_space<vmem>>, vector<64x384xf32>
    tpu.vector_store %arg4[%c0_5, %c0_6], %5 {strides = array<i32>} : memref<64x384xf32, #tpu.memory_space<vmem>>, vector<64x384xf32>,
    return
  }
  func.func @transform_0(%arg0: i32) -> (i32, i32) {
    %c0_i32 = arith.constant 0 : i32
    %c0_i32_0 = arith.constant 0 : i32
    return %arg0, %c0_i32 : i32, i32
  }
  func.func @transform_1(%arg0: i32) -> (i32, i32) {
    %c0_i32 = arith.constant 0 : i32
    %c0_i32_0 = arith.constant 0 : i32
    %c0_i32_1 = arith.constant 0 : i32
    return %c0_i32, %c0_i32_0 : i32, i32
  }
  func.func @transform_2(%arg0: i32) -> (i32, i32) {
    %c0_i32 = arith.constant 0 : i32
    %c0_i32_0 = arith.constant 0 : i32
    %c0_i32_1 = arith.constant 0 : i32
    return %c0_i32, %c0_i32_0 : i32, i32
  }
  func.func @transform_3(%arg0: i32) -> (i32, i32) {
    %c0_i32 = arith.constant 0 : i32
    %c0_i32_0 = arith.constant 0 : i32
    return %arg0, %c0_i32 : i32, i32
  }
}

</mosaic_0001>

<llo_original>
// kernel: mr_mlp_forward.1
$region0: #{mr_mlp_forward.1}
  #allocation0 [shape = 'u32[]', space=smem, size = 0x4, offset = 0x4, fixed_abs, tag = 'smem constant byte address 0x4 - core index']
  #allocation1 [shape = 'u32[144,128]{1,0:T(1,128)}', space=vmem, size = 0x12000, scoped, tag = 'internal scratch']
  %s0 = inlined_call_operand.vmem [shape: f32[64,16], index: 0, kind: input, shape index: {}]
  %s1 = inlined_call_operand.vmem [shape: f32[16,384], index: 1, kind: input, shape index: {}]
  %s2 = inlined_call_operand.vmem [shape: f32[1,384], index: 2, kind: input, shape index: {}]
  %s3 = inlined_call_operand.vmem [shape: f32[64,384], index: 3, kind: output, shape index: {}]
  %s4 = sld [smem:[#allocation0]]
  $region22: #{mr_mlp_forward.1} parent=0
    _
  %s6 = ssub.s32 1, %s4
  %s7 = scalar_select 0, %s6, %s4
  // Predicated region
  $region2: #{mr_mlp_forward.1} parent=0 // pred_check
    _
  $region3: #{mr_mlp_forward.1} parent=0 // pred_check_branch
    %9 = sbr.rel (0) target = $region5
  $region4: #{mr_mlp_forward.1} parent=0 // pred_region
    _
  $region5: #{mr_mlp_forward.1} parent=0 // pred_fallthru
    _
  // Predicated region
  $region6: #{mr_mlp_forward.1} parent=0 // pred_check
    _
  $region7: #{mr_mlp_forward.1} parent=0 // pred_check_branch
    %11 = sbr.rel (0) target = $region9
  $region8: #{mr_mlp_forward.1} parent=0 // pred_region
    _
  $region9: #{mr_mlp_forward.1} parent=0 // pred_fallthru
    _
  // Predicated region
  $region10: #{mr_mlp_forward.1} parent=0 // pred_check
    _
  $region11: #{mr_mlp_forward.1} parent=0 // pred_check_branch
    %13 = sbr.rel (0) target = $region13
  $region12: #{mr_mlp_forward.1} parent=0 // pred_region
    _
  $region13: #{mr_mlp_forward.1} parent=0 // pred_fallthru
    _
  %v14 = vld [vmem:[%s0] sm:$0xff]
  %v15 = vld [vmem:[%s0 + $0x8] sm:$0xff]
  %v16 = vld [vmem:[%s0 + $0x10] sm:$0xff]
  %v17 = vld [vmem:[%s0 + $0x18] sm:$0xff]
  %v18 = vld [vmem:[%s0 + $0x20] sm:$0xff]
  %v19 = vld [vmem:[%s0 + $0x28] sm:$0xff]
  %v20 = vld [vmem:[%s0 + $0x30] sm:$0xff]
  %v21 = vld [vmem:[%s0 + $0x38] sm:$0xff]
  %v22 = vld [vmem:[%s1] sm:$0xff]
  %v23 = vld [vmem:[%s1 + $0x8] sm:$0xff]
  %v24 = vld [vmem:[%s1 + $0x10] sm:$0xff]
  %v25 = vld [vmem:[%s1 + $0x18] sm:$0xff]
  %v26 = vld [vmem:[%s1 + $0x20] sm:$0xff]
  %v27 = vld [vmem:[%s1 + $0x28] sm:$0xff]
  %v28 = vld [vmem:[%s2] sm:$0x7]
  %v30 = vlaneseq
  %v31 = vshrl.u32 %v30, 7
  %v32 = vsub.s32 0, %v31
  %v33 = vrot.slane %v28, %v32
  %v34 = vlaneseq
  %v35 = vshrl.u32 %v34, 7
  %v36 = vsub.s32 1, %v35
  %v37 = vrot.slane %v28, %v36
  %v38 = vlaneseq
  %v39 = vshrl.u32 %v38, 7
  %v40 = vsub.s32 2, %v39
  %v41 = vrot.slane %v28, %v40
  %vm45 = vcmask 130048
  %v47 = vsel %vm45, %v14, 0
  %v50 = vsel %vm45, %v15, 0
  %v53 = vsel %vm45, %v16, 0
  %v56 = vsel %vm45, %v17, 0
  %v59 = vsel %vm45, %v18, 0
  %v62 = vsel %vm45, %v19, 0
  %v65 = vsel %vm45, %v20, 0
  %v68 = vsel %vm45, %v21, 0
  %70 = vmatprep.subr.mxu0 0.0
  %71 = vmatpush1.msra.mxu0 0.0
  %72 = vmatprep.subr.mxu0 0.0
  %73 = vmatpush1.msra.mxu0 0.0
  %74 = vmatprep.subr.mxu0 0.0
  %75 = vmatpush1.msra.mxu0 0.0
  %76 = vmatprep.subr.mxu0 0.0
  %77 = vmatpush1.msra.mxu0 0.0
  %78 = vmatprep.subr.mxu0 0.0
  %79 = vmatpush1.msra.mxu0 0.0
  %80 = vmatprep.subr.mxu0 0.0
  %81 = vmatpush1.msra.mxu0 0.0
  %82 = vmatprep.subr.mxu0 0.0
  %83 = vmatpush1.msra.mxu0 0.0
  %84 = vmatprep.subr.mxu0 0.0
  %85 = vmatpush1.msra.mxu0 0.0
  %86 = vmatprep.subr.mxu0 0.0
  %87 = vmatpush1.msra.mxu0 0.0
  %88 = vmatprep.subr.mxu0 0.0
  %89 = vmatpush1.msra.mxu0 0.0
  %90 = vmatprep.subr.mxu0 0.0
  %91 = vmatpush1.msra.mxu0 0.0
  %92 = vmatprep.subr.mxu0 0.0
  %93 = vmatpush1.msra.mxu0 0.0
  %94 = vmatprep.subr.mxu0 0.0
  %95 = vmatpush1.msra.mxu0 0.0
  %96 = vmatprep.subr.mxu0 0.0
  %97 = vmatpush1.msra.mxu0 0.0
  %98 = vmatprep.subr.mxu0 %v26
  %99 = vmatpush1.msra.mxu0 %v25
  %100 = vmatprep.subr.mxu0 %v23
  %101 = vmatpush1.msra.mxu0 %v22
  %102 = vmatprep.subr.mxu0 0.0
  %103 = vmatpush2.msra.mxu0 0.0
  %104 = vmatprep.subr.mxu0 0.0
  %105 = vmatpush2.msra.mxu0 0.0
  %106 = vmatprep.subr.mxu0 0.0
  %107 = vmatpush2.msra.mxu0 0.0
  %108 = vmatprep.subr.mxu0 0.0
  %109 = vmatpush2.msra.mxu0 0.0
  %110 = vmatprep.subr.mxu0 0.0
  %111 = vmatpush2.msra.mxu0 0.0
  %112 = vmatprep.subr.mxu0 0.0
  %113 = vmatpush2.msra.mxu0 0.0
  %114 = vmatprep.subr.mxu0 0.0
  %115 = vmatpush2.msra.mxu0 0.0
  %116 = vmatprep.subr.mxu0 0.0
  %117 = vmatpush2.msra.mxu0 0.0
  %118 = vmatprep.subr.mxu0 0.0
  %119 = vmatpush2.msra.mxu0 0.0
  %120 = vmatprep.subr.mxu0 0.0
  %121 = vmatpush2.msra.mxu0 0.0
  %122 = vmatprep.subr.mxu0 0.0
  %123 = vmatpush2.msra.mxu0 0.0
  %124 = vmatprep.subr.mxu0 0.0
  %125 = vmatpush2.msra.mxu0 0.0
  %126 = vmatprep.subr.mxu0 0.0
  %127 = vmatpush2.msra.mxu0 0.0
  %128 = vmatprep.subr.mxu0 0.0
  %129 = vmatpush2.msra.mxu0 0.0
  %130 = vmatprep.subr.mxu0 0.0
  %131 = vmatpush2.msra.mxu0 0.0
  %132 = vmatprep.subr.mxu0 0.0
  %133 = vmatpush2.msra.mxu0 0.0
  %134 = vmatprep.mubr.f32.mxu0 0.0
  %135 = vmatmul.mubr.f32.gmra.mxu0 %v47
  %v136 = vpop.f32.mrf.mxu0
  %v137 = vadd.f32 %v33, %v136
  %v138 = vpop.f32.mrf.mxu0
  %v139 = vadd.f32 %v37, %v138
  %140 = vmatprep.mubr.f32.mxu0 0.0
  %141 = vmatmul.mubr.f32.gmra.mxu0 %v50
  %v142 = vpop.f32.mrf.mxu0
  %v143 = vadd.f32 %v33, %v142
  %v144 = vpop.f32.mrf.mxu0
  %v145 = vadd.f32 %v37, %v144
  %146 = vmatprep.mubr.f32.mxu0 0.0
  %147 = vmatmul.mubr.f32.gmra.mxu0 %v53
  %v148 = vpop.f32.mrf.mxu0
  %v149 = vadd.f32 %v33, %v148
  %v150 = vpop.f32.mrf.mxu0
  %v151 = vadd.f32 %v37, %v150
  %152 = vmatprep.mubr.f32.mxu0 0.0
  %153 = vmatmul.mubr.f32.gmra.mxu0 %v56
  %v154 = vpop.f32.mrf.mxu0
  %v155 = vadd.f32 %v33, %v154
  %v156 = vpop.f32.mrf.mxu0
  %v157 = vadd.f32 %v37, %v156
  %158 = vmatprep.mubr.f32.mxu0 0.0
  %159 = vmatmul.mubr.f32.gmra.mxu0 %v59
  %v160 = vpop.f32.mrf.mxu0
  %v161 = vadd.f32 %v33, %v160
  %v162 = vpop.f32.mrf.mxu0
  %v163 = vadd.f32 %v37, %v162
  %164 = vmatprep.mubr.f32.mxu0 0.0
  %165 = vmatmul.mubr.f32.gmra.mxu0 %v62
  %v166 = vpop.f32.mrf.mxu0
  %v167 = vadd.f32 %v33, %v166
  %v168 = vpop.f32.mrf.mxu0
  %v169 = vadd.f32 %v37, %v168
  %170 = vmatprep.mubr.f32.mxu0 0.0
  %171 = vmatmul.mubr.f32.gmra.mxu0 %v65
  %v172 = vpop.f32.mrf.mxu0
  %v173 = vadd.f32 %v33, %v172
  %v174 = vpop.f32.mrf.mxu0
  %v175 = vadd.f32 %v37, %v174
  %176 = vmatprep.mubr.f32.mxu0 0.0
  %177 = vmatmul.mubr.f32.gmra.mxu0 %v68
  %v178 = vpop.f32.mrf.mxu0
  %v179 = vadd.f32 %v33, %v178
  %v180 = vpop.f32.mrf.mxu0
  %v181 = vadd.f32 %v37, %v180
  %182 = vdwg.mxu0
  %183 = vmatprep.subr.mxu0 0.0
  %184 = vmatpush1.msra.mxu0 0.0
  %185 = vmatprep.subr.mxu0 0.0
  %186 = vmatpush1.msra.mxu0 0.0
  %187 = vmatprep.subr.mxu0 0.0
  %188 = vmatpush1.msra.mxu0 0.0
  %189 = vmatprep.subr.mxu0 0.0
  %190 = vmatpush1.msra.mxu0 0.0
  %191 = vmatprep.subr.mxu0 0.0
  %192 = vmatpush1.msra.mxu0 0.0
  %193 = vmatprep.subr.mxu0 0.0
  %194 = vmatpush1.msra.mxu0 0.0
  %195 = vmatprep.subr.mxu0 0.0
  %196 = vmatpush1.msra.mxu0 0.0
  %197 = vmatprep.subr.mxu0 0.0
  %198 = vmatpush1.msra.mxu0 0.0
  %199 = vmatprep.subr.mxu0 0.0
  %200 = vmatpush1.msra.mxu0 0.0
  %201 = vmatprep.subr.mxu0 0.0
  %202 = vmatpush1.msra.mxu0 0.0
  %203 = vmatprep.subr.mxu0 0.0
  %204 = vmatpush1.msra.mxu0 0.0
  %205 = vmatprep.subr.mxu0 0.0
  %206 = vmatpush1.msra.mxu0 0.0
  %207 = vmatprep.subr.mxu0 0.0
  %208 = vmatpush1.msra.mxu0 0.0
  %209 = vmatprep.subr.mxu0 0.0
  %210 = vmatpush1.msra.mxu0 0.0
  %211 = vmatprep.subr.mxu0 0.0
  %212 = vmatpush1.msra.mxu0 %v27
  %213 = vmatprep.subr.mxu0 0.0
  %214 = vmatpush1.msra.mxu0 %v24
  %215 = vmatprep.subr.mxu0 0.0
  %216 = vmatpush2.msra.mxu0 0.0
  %217 = vmatprep.subr.mxu0 0.0
  %218 = vmatpush2.msra.mxu0 0.0
  %219 = vmatprep.subr.mxu0 0.0
  %220 = vmatpush2.msra.mxu0 0.0
  %221 = vmatprep.subr.mxu0 0.0
  %222 = vmatpush2.msra.mxu0 0.0
  %223 = vmatprep.subr.mxu0 0.0
  %224 = vmatpush2.msra.mxu0 0.0
  %225 = vmatprep.subr.mxu0 0.0
  %226 = vmatpush2.msra.mxu0 0.0
  %227 = vmatprep.subr.mxu0 0.0
  %228 = vmatpush2.msra.mxu0 0.0
  %229 = vmatprep.subr.mxu0 0.0
  %230 = vmatpush2.msra.mxu0 0.0
  %231 = vmatprep.subr.mxu0 0.0
  %232 = vmatpush2.msra.mxu0 0.0
  %233 = vmatprep.subr.mxu0 0.0
  %234 = vmatpush2.msra.mxu0 0.0
  %235 = vmatprep.subr.mxu0 0.0
  %236 = vmatpush2.msra.mxu0 0.0
  %237 = vmatprep.subr.mxu0 0.0
  %238 = vmatpush2.msra.mxu0 0.0
  %239 = vmatprep.subr.mxu0 0.0
  %240 = vmatpush2.msra.mxu0 0.0
  %241 = vmatprep.subr.mxu0 0.0
  %242 = vmatpush2.msra.mxu0 0.0
  %243 = vmatprep.subr.mxu0 0.0
  %244 = vmatpush2.msra.mxu0 0.0
  %245 = vmatprep.subr.mxu0 0.0
  %246 = vmatpush2.msra.mxu0 0.0
  %247 = vmatprep.mubr.f32.mxu0 0.0
  %248 = vmatmul.mubr.f32.gmra.mxu0 %v47
  %v249 = vpop.f32.mrf.mxu0
  %v250 = vadd.f32 %v41, %v249
  %v251 = vpop.f32.mrf.mxu0
  %252 = vmatprep.mubr.f32.mxu0 0.0
  %253 = vmatmul.mubr.f32.gmra.mxu0 %v50
  %v254 = vpop.f32.mrf.mxu0
  %v255 = vadd.f32 %v41, %v254
  %v256 = vpop.f32.mrf.mxu0
  %257 = vmatprep.mubr.f32.mxu0 0.0
  %258 = vmatmul.mubr.f32.gmra.mxu0 %v53
  %v259 = vpop.f32.mrf.mxu0
  %v260 = vadd.f32 %v41, %v259
  %v261 = vpop.f32.mrf.mxu0
  %262 = vmatprep.mubr.f32.mxu0 0.0
  %263 = vmatmul.mubr.f32.gmra.mxu0 %v56
  %v264 = vpop.f32.mrf.mxu0
  %v265 = vadd.f32 %v41, %v264
  %v266 = vpop.f32.mrf.mxu0
  %267 = vmatprep.mubr.f32.mxu0 0.0
  %268 = vmatmul.mubr.f32.gmra.mxu0 %v59
  %v269 = vpop.f32.mrf.mxu0
  %v270 = vadd.f32 %v41, %v269
  %v271 = vpop.f32.mrf.mxu0
  %272 = vmatprep.mubr.f32.mxu0 0.0
  %273 = vmatmul.mubr.f32.gmra.mxu0 %v62
  %v274 = vpop.f32.mrf.mxu0
  %v275 = vadd.f32 %v41, %v274
  %v276 = vpop.f32.mrf.mxu0
  %277 = vmatprep.mubr.f32.mxu0 0.0
  %278 = vmatmul.mubr.f32.gmra.mxu0 %v65
  %v279 = vpop.f32.mrf.mxu0
  %v280 = vadd.f32 %v41, %v279
  %v281 = vpop.f32.mrf.mxu0
  %282 = vmatprep.mubr.f32.mxu0 0.0
  %283 = vmatmul.mubr.f32.gmra.mxu0 %v68
  %v284 = vpop.f32.mrf.mxu0
  %v285 = vadd.f32 %v41, %v284
  %v286 = vpop.f32.mrf.mxu0
  %287 = vdwg.mxu0
  %288 = vst [vmem:[%s3] sm:$0xff] %v137
  %289 = vst [vmem:[%s3 + $0x8] sm:$0xff] %v139
  %290 = vst [vmem:[%s3 + $0x10] sm:$0xff] %v250
  %291 = vst [vmem:[%s3 + $0x18] sm:$0xff] %v143
  %292 = vst [vmem:[%s3 + $0x20] sm:$0xff] %v145
  %293 = vst [vmem:[%s3 + $0x28] sm:$0xff] %v255
  %294 = vst [vmem:[%s3 + $0x30] sm:$0xff] %v149
  %295 = vst [vmem:[%s3 + $0x38] sm:$0xff] %v151
  %296 = vst [vmem:[%s3 + $0x40] sm:$0xff] %v260
  %297 = vst [vmem:[%s3 + $0x48] sm:$0xff] %v155
  %298 = vst [vmem:[%s3 + $0x50] sm:$0xff] %v157
  %299 = vst [vmem:[%s3 + $0x58] sm:$0xff] %v265
  %300 = vst [vmem:[%s3 + $0x60] sm:$0xff] %v161
  %301 = vst [vmem:[%s3 + $0x68] sm:$0xff] %v163
  %302 = vst [vmem:[%s3 + $0x70] sm:$0xff] %v270
  %303 = vst [vmem:[%s3 + $0x78] sm:$0xff] %v167
  %304 = vst [vmem:[%s3 + $0x80] sm:$0xff] %v169
  %305 = vst [vmem:[%s3 + $0x88] sm:$0xff] %v275
  %306 = vst [vmem:[%s3 + $0x90] sm:$0xff] %v173
  %307 = vst [vmem:[%s3 + $0x98] sm:$0xff] %v175
  %308 = vst [vmem:[%s3 + $0xa0] sm:$0xff] %v280
  %309 = vst [vmem:[%s3 + $0xa8] sm:$0xff] %v179
  %310 = vst [vmem:[%s3 + $0xb0] sm:$0xff] %v181
  %311 = vst [vmem:[%s3 + $0xb8] sm:$0xff] %v285
  // Predicated region
  $region14: #{mr_mlp_forward.1} parent=0 // pred_check
    _
  $region15: #{mr_mlp_forward.1} parent=0 // pred_check_branch
    %313 = sbr.rel (0) target = $region17
  $region16: #{mr_mlp_forward.1} parent=0 // pred_region
    _
  $region17: #{mr_mlp_forward.1} parent=0 // pred_fallthru
    _
  // Predicated region
  $region18: #{mr_mlp_forward.1} parent=0 // pred_check
    _
  $region19: #{mr_mlp_forward.1} parent=0 // pred_check_branch
    %315 = sbr.rel (0) target = $region21
  $region20: #{mr_mlp_forward.1} parent=0 // pred_region
    _
  $region21: #{mr_mlp_forward.1} parent=0 // pred_fallthru
    _

</llo_original>
